<compile_context>
chip_gen: v6e
topology: v6e:2x2x1
jax: 0.10.0
libtpu: 0.0.40
codegen_flags: <defaults>
</compile_context>

<pallas_src>
import math

import jax
import jax.numpy as jnp
from jax.experimental import pallas as pl
from jax.experimental.pallas import tpu as pltpu


def _vq_mlp_kernel(sa_ref, w1_ref, b1_ref, w2_ref, b2_ref, w3t_ref, q_ref):
    """One batch-tile step of the fused 3-layer ensemble critic MLP.

    sa_ref : (TB, D) bf16      shared input tile (2-D input path), or
             (E, TB, D) bf16   per-critic input tile (3-D input path)
    w1_ref : (E, D, H) bf16    b1_ref : (E, 1, H) f32
    w2_ref : (E, H, H) bf16    b2_ref : (E, 1, H) f32
    w3t_ref: (E, 1, H) f32     (last layer pre-transposed in the wrapper)
    q_ref  : (E, TB) f32       lane-dense output (batch on the lane axis)
    """
    E = w1_ref.shape[0]
    per_critic_input = sa_ref.ndim == 3
    tb = q_ref.shape[-1]

    rows = []
    for e in range(E):  # E is small & static -> fully unrolled at trace time
        sa_e = sa_ref[e] if per_critic_input else sa_ref[...]
        h = jnp.dot(sa_e, w1_ref[e], preferred_element_type=jnp.float32)
        h = jnp.maximum(h + b1_ref[e], 0.0)
        h = jnp.dot(h.astype(jnp.bfloat16), w2_ref[e],
                    preferred_element_type=jnp.float32)
        h = jnp.maximum(h + b2_ref[e], 0.0)
        # hidden -> 1 head: VPU multiply + lane reduction (avoids N=1 matmul).
        q_e = jnp.sum(h * w3t_ref[e], axis=-1)          # (TB,)
        rows.append(q_e.reshape(1, tb))                 # lane-major row
    q_ref[...] = jnp.concatenate(rows, axis=0).astype(q_ref.dtype)


def vectorized_q_pallas(state, action, params, *, max_batch_tile=1024):
    """Pallas forward of VectorizedQ.  Returns q of shape (num_critics, batch)."""
    w1, b1, w2, b2, w3, b3 = params
    E, D, H = w1.shape

    sa = jnp.concatenate([state, action], axis=-1)
    assert sa.shape[-1] == D, (sa.shape, D)

    if sa.ndim == 2:
        per_critic_input = False
        B = sa.shape[0]
    else:
        assert sa.ndim == 3 and sa.shape[0] == E, sa.shape
        per_critic_input = True
        B = sa.shape[1]

    # Batch tiling: full-extent block for small B (no (8,128) constraint),
    # otherwise 128-aligned tiles (lane-dense, unmasked stores) with zero
    # padding of the batch axis (padded rows are sliced off afterwards).
    if B <= max_batch_tile:
        TB, n_bt, Bp = B, 1, B
    else:
        TB = max(128, (max_batch_tile // 128) * 128)
        n_bt = pl.cdiv(B, TB)
        Bp = n_bt * TB

    # bf16 matmul operands for the MXU (f32 accumulation inside the kernel).
    sa = sa.astype(jnp.bfloat16)
    if Bp != B:
        pad = Bp - B
        if per_critic_input:
            sa = jnp.pad(sa, ((0, 0), (0, pad), (0, 0)))
        else:
            sa = jnp.pad(sa, ((0, pad), (0, 0)))

    if per_critic_input:
        sa_spec = pl.BlockSpec((E, TB, D), lambda i: (0, i, 0))
    else:
        sa_spec = pl.BlockSpec((TB, D), lambda i: (i, 0))

    # Weight prep (layout plumbing stays in the wrapper): bf16 MXU weights,
    # f32 biases, last layer pre-transposed to (E, 1, H) for the VPU head.
    w1b = w1.astype(jnp.bfloat16)
    w2b = w2.astype(jnp.bfloat16)
    b1f = b1.astype(jnp.float32)
    b2f = b2.astype(jnp.float32)
    w3t = jnp.swapaxes(w3, 1, 2).astype(jnp.float32)

    def resident(shape):
        # Full-extent block, constant index_map -> DMA'd once, reused per step.
        return pl.BlockSpec(shape, lambda i, _n=len(shape): (0,) * _n)

    q = pl.pallas_call(
        _vq_mlp_kernel,
        out_shape=jax.ShapeDtypeStruct((E, Bp), jnp.float32),
        grid=(n_bt,),
        in_specs=[
            sa_spec,
            resident((E, D, H)),
            resident((E, 1, H)),
            resident((E, H, H)),
            resident((E, 1, H)),
            resident((E, 1, H)),
        ],
        out_specs=pl.BlockSpec((E, TB), lambda i: (0, i)),
        compiler_params=pltpu.CompilerParams(
            # Single (batch-tile) grid axis; independent tiles -> parallel so
            # v7x's two TensorCores split the work (no-op on v5e/v6e).
            dimension_semantics=("parallel",),
            # Safe on every generation: > v5e/v6e/v7x scoped defaults,
            # < v7x's 64 MiB physical VMEM.
            vmem_limit_bytes=48 * 1024 * 1024,
        ),
    )(sa, w1b, b1f, w2b, b2f, w3t)

    # Fold the final bias outside the kernel and drop batch padding.
    return q[:, :B] + b3.reshape(E, 1).astype(jnp.float32)


# ----------------------------- reference + demo -----------------------------

def vectorized_q_ref(state, action, params, num_critics):
    w1, b1, w2, b2, w3, b3 = params
    sa = jnp.concatenate([state, action], axis=-1)
    if sa.ndim == 2:
        sa = jnp.broadcast_to(sa[None], (num_critics,) + sa.shape)
    h = jax.nn.relu(jnp.einsum("ebd,edh->ebh", sa, w1) + b1)
    h = jax.nn.relu(jnp.einsum("ebd,edh->ebh", h, w2) + b2)
    q = jnp.einsum("ebd,edh->ebh", h, w3) + b3
    return q[..., 0]


def init_vectorized_q_params(key, state_dim, action_dim, hidden_dim, num_critics):
    d_in = state_dim + action_dim
    layer_dims = [(d_in, hidden_dim), (hidden_dim, hidden_dim), (hidden_dim, 1)]
    params = []
    for fan_in, fan_out in layer_dims:
        key, kw, kb = jax.random.split(key, 3)
        bound = 1.0 / math.sqrt(fan_in)
        w = jax.random.uniform(kw, (num_critics, fan_in, fan_out), jnp.float32,
                               -bound, bound)
        b = jax.random.uniform(kb, (num_critics, 1, fan_out), jnp.float32,
                               -bound, bound)
        params += [w, b]
    return tuple(params)


if __name__ == "__main__":
    key = jax.random.PRNGKey(0)
    state_dim, action_dim, hidden_dim, num_critics = 17, 6, 32, 4
    batch = 32

    key, k_p, k_s, k_a, k_s3, k_a3, k_sl, k_al = jax.random.split(key, 8)
    params = init_vectorized_q_params(k_p, state_dim, action_dim, hidden_dim,
                                      num_critics)

    # --- 2-D input path (broadcast across the ensemble) ---
    state = jax.random.normal(k_s, (batch, state_dim), jnp.float32)
    action = jax.random.normal(k_a, (batch, action_dim), jnp.float32)
    q = jax.block_until_ready(vectorized_q_pallas(state, action, params))
    q_ref = vectorized_q_ref(state, action, params, num_critics)
    assert q.shape == (num_critics, batch), q.shape
    assert jnp.allclose(q, q_ref, atol=5e-2, rtol=5e-2)

    # --- 3-D per-critic input path ---
    state3 = jax.random.normal(k_s3, (num_critics, batch, state_dim), jnp.float32)
    action3 = jax.random.normal(k_a3, (num_critics, batch, action_dim), jnp.float32)
    q3 = jax.block_until_ready(vectorized_q_pallas(state3, action3, params))
    q3_ref = vectorized_q_ref(state3, action3, params, num_critics)
    assert q3.shape == (num_critics, batch), q3.shape
    assert jnp.allclose(q3, q3_ref, atol=5e-2, rtol=5e-2)

    # --- batch-tiling + padding path (B > tile, non-multiple of tile) ---
    big_batch = 300
    state_l = jax.random.normal(k_sl, (big_batch, state_dim), jnp.float32)
    action_l = jax.random.normal(k_al, (big_batch, action_dim), jnp.float32)
    ql = jax.block_until_ready(
        vectorized_q_pallas(state_l, action_l, params, max_batch_tile=128))
    ql_ref = vectorized_q_ref(state_l, action_l, params, num_critics)
    assert ql.shape == (num_critics, big_batch), ql.shape
    assert jnp.allclose(ql, ql_ref, atol=5e-2, rtol=5e-2)

    print("KERNEL_OK")
</pallas_src>

<mosaic_0001>
module attributes {stable_mosaic.version = 11 : i64} {
  func.func @_vq_mlp_kernel(%arg0: i32, %arg1: memref<32x23xbf16, #tpu.memory_space<vmem>>, %arg2: memref<4x23x32xbf16, #tpu.memory_space<vmem>>, %arg3: memref<4x1x32xf32, #tpu.memory_space<vmem>>, %arg4: memref<4x32x32xbf16, #tpu.memory_space<vmem>>, %arg5: memref<4x1x32xf32, #tpu.memory_space<vmem>>, %arg6: memref<4x1x32xf32, #tpu.memory_space<vmem>>, %arg7: memref<4x32xf32, #tpu.memory_space<vmem>>) attributes {dimension_semantics = [#tpu.dimension_semantics<parallel>], iteration_bounds = array<i64: 1>, scalar_prefetch = 0 : i64, scratch_operands = 0 : i64, tpu.core_type = #tpu.core_type<tc>, window_params = [{transform_indices = @transform_0, window_bounds = array<i64: 32, 23>}, {pipeline_mode = #tpu.pipeline_mode<synchronous>, transform_indices = @transform_1, window_bounds = array<i64: 4, 23, 32>}, {pipeline_mode = #tpu.pipeline_mode<synchronous>, transform_indices = @transform_2, window_bounds = array<i64: 4, 1, 32>}, {pipeline_mode = #tpu.pipeline_mode<synchronous>, transform_indices = @transform_3, window_bounds = array<i64: 4, 32, 32>}, {pipeline_mode = #tpu.pipeline_mode<synchronous>, transform_indices = @transform_4, window_bounds = array<i64: 4, 1, 32>}, {pipeline_mode = #tpu.pipeline_mode<synchronous>, transform_indices = @transform_5, window_bounds = array<i64: 4, 1, 32>}, {transform_indices = @transform_6, window_bounds = array<i64: 4, 32>}]} {
    %c0 = arith.constant 0 : index
    %c0_0 = arith.constant 0 : index
    %0 = vector.load %arg1[%c0, %c0_0] : memref<32x23xbf16, #tpu.memory_space<vmem>>, vector<32x23xbf16>
    %c0_1 = arith.constant 0 : index
    %c0_2 = arith.constant 0 : index
    %c0_3 = arith.constant 0 : index
    %1 = vector.load %arg2[%c0_1, %c0_2, %c0_3] : memref<4x23x32xbf16, #tpu.memory_space<vmem>>, vector<1x23x32xbf16>
    %2 = vector.shape_cast %1 : vector<1x23x32xbf16> to vector<23x32xbf16>
    %cst = arith.constant dense<0.000000e+00> : vector<32x32xf32>
    %3 = tpu.matmul %0, %2, %cst {dimension_numbers = #tpu.dot_dimension_numbers<[1], [0], [0], [1], [0, 0, 1, 1], [], []>} : vector<32x23xbf16>, vector<23x32xbf16>, vector<32x32xf32> -> vector<32x32xf32>
    %c0_4 = arith.constant 0 : index
    %c0_5 = arith.constant 0 : index
    %c0_6 = arith.constant 0 : index
    %4 = vector.load %arg3[%c0_4, %c0_5, %c0_6] : memref<4x1x32xf32, #tpu.memory_space<vmem>>, vector<1x1x32xf32>
    %5 = vector.shape_cast %4 : vector<1x1x32xf32> to vector<1x32xf32>
    %6 = vector.broadcast %5 : vector<1x32xf32> to vector<32x32xf32>
    %7 = arith.addf %3, %6 : vector<32x32xf32>
    %cst_7 = arith.constant 0.000000e+00 : f32
    %8 = vector.broadcast %cst_7 : f32 to vector<32x32xf32>
    %9 = arith.maximumf %7, %8 : vector<32x32xf32>
    %10 = arith.truncf %9 : vector<32x32xf32> to vector<32x32xbf16>
    %c0_8 = arith.constant 0 : index
    %c0_9 = arith.constant 0 : index
    %c0_10 = arith.constant 0 : index
    %11 = vector.load %arg4[%c0_8, %c0_9, %c0_10] : memref<4x32x32xbf16, #tpu.memory_space<vmem>>, vector<1x32x32xbf16>
    %12 = vector.shape_cast %11 : vector<1x32x32xbf16> to vector<32x32xbf16>
    %cst_11 = arith.constant dense<0.000000e+00> : vector<32x32xf32>
    %13 = tpu.matmul %10, %12, %cst_11 {dimension_numbers = #tpu.dot_dimension_numbers<[1], [0], [0], [1], [0, 0, 1, 1], [], []>} : vector<32x32xbf16>, vector<32x32xbf16>, vector<32x32xf32> -> vector<32x32xf32>
    %c0_12 = arith.constant 0 : index
    %c0_13 = arith.constant 0 : index
    %c0_14 = arith.constant 0 : index
    %14 = vector.load %arg5[%c0_12, %c0_13, %c0_14] : memref<4x1x32xf32, #tpu.memory_space<vmem>>, vector<1x1x32xf32>
    %15 = vector.shape_cast %14 : vector<1x1x32xf32> to vector<1x32xf32>
    %16 = vector.broadcast %15 : vector<1x32xf32> to vector<32x32xf32>
    %17 = arith.addf %13, %16 : vector<32x32xf32>
    %cst_15 = arith.constant 0.000000e+00 : f32
    %18 = vector.broadcast %cst_15 : f32 to vector<32x32xf32>
    %19 = arith.maximumf %17, %18 : vector<32x32xf32>
    %c0_16 = arith.constant 0 : index
    %c0_17 = arith.constant 0 : index
    %c0_18 = arith.constant 0 : index
    %20 = vector.load %arg6[%c0_16, %c0_17, %c0_18] : memref<4x1x32xf32, #tpu.memory_space<vmem>>, vector<1x1x32xf32>
    %21 = vector.shape_cast %20 : vector<1x1x32xf32> to vector<1x32xf32>
    %22 = vector.broadcast %21 : vector<1x32xf32> to vector<32x32xf32>
    %23 = arith.mulf %19, %22 : vector<32x32xf32>
    %cst_19 = arith.constant dense<0.000000e+00> : vector<32xf32>
    %24 = vector.multi_reduction <add>, %23, %cst_19 [1] : vector<32x32xf32> to vector<32xf32>
    %25 = vector.shape_cast %24 : vector<32xf32> to vector<1x32xf32>
    %c0_20 = arith.constant 0 : index
    %c0_21 = arith.constant 0 : index
    %26 = vector.load %arg1[%c0_20, %c0_21] : memref<32x23xbf16, #tpu.memory_space<vmem>>, vector<32x23xbf16>
    %c1 = arith.constant 1 : index
    %c0_22 = arith.constant 0 : index
    %c0_23 = arith.constant 0 : index
    %27 = vector.load %arg2[%c1, %c0_22, %c0_23] : memref<4x23x32xbf16, #tpu.memory_space<vmem>>, vector<1x23x32xbf16>
    %28 = vector.shape_cast %27 : vector<1x23x32xbf16> to vector<23x32xbf16>
    %cst_24 = arith.constant dense<0.000000e+00> : vector<32x32xf32>
    %29 = tpu.matmul %26, %28, %cst_24 {dimension_numbers = #tpu.dot_dimension_numbers<[1], [0], [0], [1], [0, 0, 1, 1], [], []>} : vector<32x23xbf16>, vector<23x32xbf16>, vector<32x32xf32> -> vector<32x32xf32>
    %c1_25 = arith.constant 1 : index
    %c0_26 = arith.constant 0 : index
    %c0_27 = arith.constant 0 : index
    %30 = vector.load %arg3[%c1_25, %c0_26, %c0_27] : memref<4x1x32xf32, #tpu.memory_space<vmem>>, vector<1x1x32xf32>
    %31 = vector.shape_cast %30 : vector<1x1x32xf32> to vector<1x32xf32>
    %32 = vector.broadcast %31 : vector<1x32xf32> to vector<32x32xf32>
    %33 = arith.addf %29, %32 : vector<32x32xf32>
    %cst_28 = arith.constant 0.000000e+00 : f32
    %34 = vector.broadcast %cst_28 : f32 to vector<32x32xf32>
    %35 = arith.maximumf %33, %34 : vector<32x32xf32>
    %36 = arith.truncf %35 : vector<32x32xf32> to vector<32x32xbf16>
    %c1_29 = arith.constant 1 : index
    %c0_30 = arith.constant 0 : index
    %c0_31 = arith.constant 0 : index
    %37 = vector.load %arg4[%c1_29, %c0_30, %c0_31] : memref<4x32x32xbf16, #tpu.memory_space<vmem>>, vector<1x32x32xbf16>
    %38 = vector.shape_cast %37 : vector<1x32x32xbf16> to vector<32x32xbf16>
    %cst_32 = arith.constant dense<0.000000e+00> : vector<32x32xf32>
    %39 = tpu.matmul %36, %38, %cst_32 {dimension_numbers = #tpu.dot_dimension_numbers<[1], [0], [0], [1], [0, 0, 1, 1], [], []>} : vector<32x32xbf16>, vector<32x32xbf16>, vector<32x32xf32> -> vector<32x32xf32>
    %c1_33 = arith.constant 1 : index
    %c0_34 = arith.constant 0 : index
    %c0_35 = arith.constant 0 : index
    %40 = vector.load %arg5[%c1_33, %c0_34, %c0_35] : memref<4x1x32xf32, #tpu.memory_space<vmem>>, vector<1x1x32xf32>
    %41 = vector.shape_cast %40 : vector<1x1x32xf32> to vector<1x32xf32>
    %42 = vector.broadcast %41 : vector<1x32xf32> to vector<32x32xf32>
    %43 = arith.addf %39, %42 : vector<32x32xf32>
    %cst_36 = arith.constant 0.000000e+00 : f32
    %44 = vector.broadcast %cst_36 : f32 to vector<32x32xf32>
    %45 = arith.maximumf %43, %44 : vector<32x32xf32>
    %c1_37 = arith.constant 1 : index
    %c0_38 = arith.constant 0 : index
    %c0_39 = arith.constant 0 : index
    %46 = vector.load %arg6[%c1_37, %c0_38, %c0_39] : memref<4x1x32xf32, #tpu.memory_space<vmem>>, vector<1x1x32xf32>
    %47 = vector.shape_cast %46 : vector<1x1x32xf32> to vector<1x32xf32>
    %48 = vector.broadcast %47 : vector<1x32xf32> to vector<32x32xf32>
    %49 = arith.mulf %45, %48 : vector<32x32xf32>
    %cst_40 = arith.constant dense<0.000000e+00> : vector<32xf32>
    %50 = vector.multi_reduction <add>, %49, %cst_40 [1] : vector<32x32xf32> to vector<32xf32>
    %51 = vector.shape_cast %50 : vector<32xf32> to vector<1x32xf32>
    %c0_41 = arith.constant 0 : index
    %c0_42 = arith.constant 0 : index
    %52 = vector.load %arg1[%c0_41, %c0_42] : memref<32x23xbf16, #tpu.memory_space<vmem>>, vector<32x23xbf16>
    %c2 = arith.constant 2 : index
    %c0_43 = arith.constant 0 : index
    %c0_44 = arith.constant 0 : index
    %53 = vector.load %arg2[%c2, %c0_43, %c0_44] : memref<4x23x32xbf16, #tpu.memory_space<vmem>>, vector<1x23x32xbf16>
    %54 = vector.shape_cast %53 : vector<1x23x32xbf16> to vector<23x32xbf16>
    %cst_45 = arith.constant dense<0.000000e+00> : vector<32x32xf32>
    %55 = tpu.matmul %52, %54, %cst_45 {dimension_numbers = #tpu.dot_dimension_numbers<[1], [0], [0], [1], [0, 0, 1, 1], [], []>} : vector<32x23xbf16>, vector<23x32xbf16>, vector<32x32xf32> -> vector<32x32xf32>
    %c2_46 = arith.constant 2 : index
    %c0_47 = arith.constant 0 : index
    %c0_48 = arith.constant 0 : index
    %56 = vector.load %arg3[%c2_46, %c0_47, %c0_48] : memref<4x1x32xf32, #tpu.memory_space<vmem>>, vector<1x1x32xf32>
    %57 = vector.shape_cast %56 : vector<1x1x32xf32> to vector<1x32xf32>
    %58 = vector.broadcast %57 : vector<1x32xf32> to vector<32x32xf32>
    %59 = arith.addf %55, %58 : vector<32x32xf32>
    %cst_49 = arith.constant 0.000000e+00 : f32
    %60 = vector.broadcast %cst_49 : f32 to vector<32x32xf32>
    %61 = arith.maximumf %59, %60 : vector<32x32xf32>
    %62 = arith.truncf %61 : vector<32x32xf32> to vector<32x32xbf16>
    %c2_50 = arith.constant 2 : index
    %c0_51 = arith.constant 0 : index
    %c0_52 = arith.constant 0 : index
    %63 = vector.load %arg4[%c2_50, %c0_51, %c0_52] : memref<4x32x32xbf16, #tpu.memory_space<vmem>>, vector<1x32x32xbf16>
    %64 = vector.shape_cast %63 : vector<1x32x32xbf16> to vector<32x32xbf16>
    %cst_53 = arith.constant dense<0.000000e+00> : vector<32x32xf32>
    %65 = tpu.matmul %62, %64, %cst_53 {dimension_numbers = #tpu.dot_dimension_numbers<[1], [0], [0], [1], [0, 0, 1, 1], [], []>} : vector<32x32xbf16>, vector<32x32xbf16>, vector<32x32xf32> -> vector<32x32xf32>
    %c2_54 = arith.constant 2 : index
    %c0_55 = arith.constant 0 : index
    %c0_56 = arith.constant 0 : index
    %66 = vector.load %arg5[%c2_54, %c0_55, %c0_56] : memref<4x1x32xf32, #tpu.memory_space<vmem>>, vector<1x1x32xf32>
    %67 = vector.shape_cast %66 : vector<1x1x32xf32> to vector<1x32xf32>
    %68 = vector.broadcast %67 : vector<1x32xf32> to vector<32x32xf32>
    %69 = arith.addf %65, %68 : vector<32x32xf32>
    %cst_57 = arith.constant 0.000000e+00 : f32
    %70 = vector.broadcast %cst_57 : f32 to vector<32x32xf32>
    %71 = arith.maximumf %69, %70 : vector<32x32xf32>
    %c2_58 = arith.constant 2 : index
    %c0_59 = arith.constant 0 : index
    %c0_60 = arith.constant 0 : index
    %72 = vector.load %arg6[%c2_58, %c0_59, %c0_60] : memref<4x1x32xf32, #tpu.memory_space<vmem>>, vector<1x1x32xf32>
    %73 = vector.shape_cast %72 : vector<1x1x32xf32> to vector<1x32xf32>
    %74 = vector.broadcast %73 : vector<1x32xf32> to vector<32x32xf32>
    %75 = arith.mulf %71, %74 : vector<32x32xf32>
    %cst_61 = arith.constant dense<0.000000e+00> : vector<32xf32>
    %76 = vector.multi_reduction <add>, %75, %cst_61 [1] : vector<32x32xf32> to vector<32xf32>
    %77 = vector.shape_cast %76 : vector<32xf32> to vector<1x32xf32>
    %c0_62 = arith.constant 0 : index
    %c0_63 = arith.constant 0 : index
    %78 = vector.load %arg1[%c0_62, %c0_63] : memref<32x23xbf16, #tpu.memory_space<vmem>>, vector<32x23xbf16>
    %c3 = arith.constant 3 : index
    %c0_64 = arith.constant 0 : index
    %c0_65 = arith.constant 0 : index
    %79 = vector.load %arg2[%c3, %c0_64, %c0_65] : memref<4x23x32xbf16, #tpu.memory_space<vmem>>, vector<1x23x32xbf16>
    %80 = vector.shape_cast %79 : vector<1x23x32xbf16> to vector<23x32xbf16>
    %cst_66 = arith.constant dense<0.000000e+00> : vector<32x32xf32>
    %81 = tpu.matmul %78, %80, %cst_66 {dimension_numbers = #tpu.dot_dimension_numbers<[1], [0], [0], [1], [0, 0, 1, 1], [], []>} : vector<32x23xbf16>, vector<23x32xbf16>, vector<32x32xf32> -> vector<32x32xf32>
    %c3_67 = arith.constant 3 : index
    %c0_68 = arith.constant 0 : index
    %c0_69 = arith.constant 0 : index
    %82 = vector.load %arg3[%c3_67, %c0_68, %c0_69] : memref<4x1x32xf32, #tpu.memory_space<vmem>>, vector<1x1x32xf32>
    %83 = vector.shape_cast %82 : vector<1x1x32xf32> to vector<1x32xf32>
    %84 = vector.broadcast %83 : vector<1x32xf32> to vector<32x32xf32>
    %85 = arith.addf %81, %84 : vector<32x32xf32>
    %cst_70 = arith.constant 0.000000e+00 : f32
    %86 = vector.broadcast %cst_70 : f32 to vector<32x32xf32>
    %87 = arith.maximumf %85, %86 : vector<32x32xf32>
    %88 = arith.truncf %87 : vector<32x32xf32> to vector<32x32xbf16>
    %c3_71 = arith.constant 3 : index
    %c0_72 = arith.constant 0 : index
    %c0_73 = arith.constant 0 : index
    %89 = vector.load %arg4[%c3_71, %c0_72, %c0_73] : memref<4x32x32xbf16, #tpu.memory_space<vmem>>, vector<1x32x32xbf16>
    %90 = vector.shape_cast %89 : vector<1x32x32xbf16> to vector<32x32xbf16>
    %cst_74 = arith.constant dense<0.000000e+00> : vector<32x32xf32>
    %91 = tpu.matmul %88, %90, %cst_74 {dimension_numbers = #tpu.dot_dimension_numbers<[1], [0], [0], [1], [0, 0, 1, 1], [], []>} : vector<32x32xbf16>, vector<32x32xbf16>, vector<32x32xf32> -> vector<32x32xf32>
    %c3_75 = arith.constant 3 : index
    %c0_76 = arith.constant 0 : index
    %c0_77 = arith.constant 0 : index
    %92 = vector.load %arg5[%c3_75, %c0_76, %c0_77] : memref<4x1x32xf32, #tpu.memory_space<vmem>>, vector<1x1x32xf32>
    %93 = vector.shape_cast %92 : vector<1x1x32xf32> to vector<1x32xf32>
    %94 = vector.broadcast %93 : vector<1x32xf32> to vector<32x32xf32>
    %95 = arith.addf %91, %94 : vector<32x32xf32>
    %cst_78 = arith.constant 0.000000e+00 : f32
    %96 = vector.broadcast %cst_78 : f32 to vector<32x32xf32>
    %97 = arith.maximumf %95, %96 : vector<32x32xf32>
    %c3_79 = arith.constant 3 : index
    %c0_80 = arith.constant 0 : index
    %c0_81 = arith.constant 0 : index
    %98 = vector.load %arg6[%c3_79, %c0_80, %c0_81] : memref<4x1x32xf32, #tpu.memory_space<vmem>>, vector<1x1x32xf32>
    %99 = vector.shape_cast %98 : vector<1x1x32xf32> to vector<1x32xf32>
    %100 = vector.broadcast %99 : vector<1x32xf32> to vector<32x32xf32>
    %101 = arith.mulf %97, %100 : vector<32x32xf32>
    %cst_82 = arith.constant dense<0.000000e+00> : vector<32xf32>
    %102 = vector.multi_reduction <add>, %101, %cst_82 [1] : vector<32x32xf32> to vector<32xf32>
    %103 = vector.shape_cast %102 : vector<32xf32> to vector<1x32xf32>
    %104 = tpu.concatenate %25, %51, %77, %103 in 0 : vector<1x32xf32>, vector<1x32xf32>, vector<1x32xf32>, vector<1x32xf32> -> vector<4x32xf32>
    %c0_83 = arith.constant 0 : index
    %c0_84 = arith.constant 0 : index
    %105 = vector.load %arg7[%c0_83, %c0_84] : memref<4x32xf32, #tpu.memory_space<vmem>>, vector<4x32xf32>
    tpu.vector_store %arg7[%c0_83, %c0_84], %104 {strides = array<i32>} : memref<4x32xf32, #tpu.memory_space<vmem>>, vector<4x32xf32>,
    return
  }
  func.func @transform_0(%arg0: i32) -> (i32, i32) {
    %c0_i32 = arith.constant 0 : i32
    %c0_i32_0 = arith.constant 0 : i32
    return %arg0, %c0_i32 : i32, i32
  }
  func.func @transform_1(%arg0: i32) -> (i32, i32, i32) {
    %c0_i32 = arith.constant 0 : i32
    %c0_i32_0 = arith.constant 0 : i32
    %c0_i32_1 = arith.constant 0 : i32
    %c0_i32_2 = arith.constant 0 : i32
    return %c0_i32, %c0_i32_0, %c0_i32_1 : i32, i32, i32
  }
  func.func @transform_2(%arg0: i32) -> (i32, i32, i32) {
    %c0_i32 = arith.constant 0 : i32
    %c0_i32_0 = arith.constant 0 : i32
    %c0_i32_1 = arith.constant 0 : i32
    %c0_i32_2 = arith.constant 0 : i32
    return %c0_i32, %c0_i32_0, %c0_i32_1 : i32, i32, i32
  }
  func.func @transform_3(%arg0: i32) -> (i32, i32, i32) {
    %c0_i32 = arith.constant 0 : i32
    %c0_i32_0 = arith.constant 0 : i32
    %c0_i32_1 = arith.constant 0 : i32
    %c0_i32_2 = arith.constant 0 : i32
    return %c0_i32, %c0_i32_0, %c0_i32_1 : i32, i32, i32
  }
  func.func @transform_4(%arg0: i32) -> (i32, i32, i32) {
    %c0_i32 = arith.constant 0 : i32
    %c0_i32_0 = arith.constant 0 : i32
    %c0_i32_1 = arith.constant 0 : i32
    %c0_i32_2 = arith.constant 0 : i32
    return %c0_i32, %c0_i32_0, %c0_i32_1 : i32, i32, i32
  }
  func.func @transform_5(%arg0: i32) -> (i32, i32, i32) {
    %c0_i32 = arith.constant 0 : i32
    %c0_i32_0 = arith.constant 0 : i32
    %c0_i32_1 = arith.constant 0 : i32
    %c0_i32_2 = arith.constant 0 : i32
    return %c0_i32, %c0_i32_0, %c0_i32_1 : i32, i32, i32
  }
  func.func @transform_6(%arg0: i32) -> (i32, i32) {
    %c0_i32 = arith.constant 0 : i32
    %c0_i32_0 = arith.constant 0 : i32
    return %c0_i32, %arg0 : i32, i32
  }
}

</mosaic_0001>

<llo_original>
// kernel: tpu_custom_call.1
$region0: #{tpu_custom_call.1}
  #allocation0 [shape = 'u32[]', space=smem, size = 0x4, offset = 0x4, fixed_abs, tag = 'smem constant byte address 0x4 - core index']
  #allocation1 [shape = 'u32[144,128]{1,0:T(1,128)}', space=vmem, size = 0x12000, scoped, tag = 'internal scratch']
  %s0 = inlined_call_operand.vmem [shape: bf16[32,23], index: 0, kind: input, shape index: {}]
  %s1 = inlined_call_operand.vmem [shape: bf16[4,23,32], index: 1, kind: input, shape index: {}]
  %s2 = inlined_call_operand.vmem [shape: f32[4,1,32], index: 2, kind: input, shape index: {}]
  %s3 = inlined_call_operand.vmem [shape: bf16[4,32,32], index: 3, kind: input, shape index: {}]
  %s4 = inlined_call_operand.vmem [shape: f32[4,1,32], index: 4, kind: input, shape index: {}]
  %s5 = inlined_call_operand.vmem [shape: f32[4,1,32], index: 5, kind: input, shape index: {}]
  %s6 = inlined_call_operand.hbm [shape: f32[4,32], index: 6, kind: output, shape index: {}]
  %s7 = sld [smem:[#allocation0]]
  $region34: #{tpu_custom_call.1} parent=0
    _
  %s9 = ssub.s32 1, %s7
  %s10 = scalar_select 0, %s9, %s7
  $region1: #{tpu_custom_call.1} parent=0
    #allocation2 [shape = 'u8[2048]{0}', space=vmem, size = 0x800, scoped, tag = 'output window, operand 0, single buffered']
    #allocation3 [shape = 's32[1]{0}', space=sflag, size = 0x4, scoped, tag = 'scoped memory for tpu_custom_call.1']
    %11 = vsyncpa [#allocation3], 0
    // Predicated region
    $region2: #{tpu_custom_call.1} parent=1 // pred_check
      _
    $region3: #{tpu_custom_call.1} parent=1 // pred_check_branch
      %13 = sbr.rel (0) target = $region5
    $region4: #{tpu_custom_call.1} parent=1 // pred_region
      _
    $region5: #{tpu_custom_call.1} parent=1 // pred_fallthru
      _
    // Predicated region
    $region6: #{tpu_custom_call.1} parent=1 // pred_check
      _
    $region7: #{tpu_custom_call.1} parent=1 // pred_check_branch
      %15 = sbr.rel (0) target = $region9
    $region8: #{tpu_custom_call.1} parent=1 // pred_region
      _
    $region9: #{tpu_custom_call.1} parent=1 // pred_fallthru
      _
    // Predicated region
    $region10: #{tpu_custom_call.1} parent=1 // pred_check
      _
    $region11: #{tpu_custom_call.1} parent=1 // pred_check_branch
      %17 = sbr.rel (0) target = $region13
    $region12: #{tpu_custom_call.1} parent=1 // pred_region
      _
    $region13: #{tpu_custom_call.1} parent=1 // pred_fallthru
      _
    // Predicated region
    $region14: #{tpu_custom_call.1} parent=1 // pred_check
      _
    $region15: #{tpu_custom_call.1} parent=1 // pred_check_branch
      %19 = sbr.rel (0) target = $region17
    $region16: #{tpu_custom_call.1} parent=1 // pred_region
      _
    $region17: #{tpu_custom_call.1} parent=1 // pred_fallthru
      _
    // Predicated region
    $region18: #{tpu_custom_call.1} parent=1 // pred_check
      _
    $region19: #{tpu_custom_call.1} parent=1 // pred_check_branch
      %21 = sbr.rel (0) target = $region21
    $region20: #{tpu_custom_call.1} parent=1 // pred_region
      _
    $region21: #{tpu_custom_call.1} parent=1 // pred_fallthru
      _
    // Predicated region
    $region22: #{tpu_custom_call.1} parent=1 // pred_check
      _
    $region23: #{tpu_custom_call.1} parent=1 // pred_check_branch
      %23 = sbr.rel (0) target = $region25
    $region24: #{tpu_custom_call.1} parent=1 // pred_region
      _
    $region25: #{tpu_custom_call.1} parent=1 // pred_fallthru
      _
    %v25 = vld [vmem:[%s0] sm:$0xf]
    %v26 = vld [vmem:[%s0 + $0x4] sm:$0xf]
    %v27 = vld [vmem:[%s0 + $0x8] sm:$0xf]
    %v28 = vld [vmem:[%s0 + $0xc] sm:$0xf]
    %v29 = vld [vmem:[%s1] sm:$0xf]
    %v30 = vld [vmem:[%s1 + $0x4] sm:$0xf]
    %v31 = vld [vmem:[%s1 + $0x8] sm:$0xf]
    %v32 = vld [vmem:[%s2] sm:$0x1]
    %v34 = vlaneseq
    %v35 = vshrl.u32 %v34, 7
    %v36 = vsub.s32 0, %v35
    %v37 = vrot.slane %v32, %v36
    %v43 = vunpack.c.l.b16 %v25
    %v44 = vunpack.c.l.b16 %v26
    %v45 = vunpack.c.l.b16 %v27
    %v46 = vunpack.c.l.b16 %v28
    %v47 = vpack.c.b16 %v44, %v43
    %v48 = vpack.c.b16 %v46, %v45
    %v52 = vunpack.c.l.b16 %v29
    %v53 = vunpack.c.l.b16 %v30
    %v54 = vunpack.c.l.b16 %v31
    %v55 = vpack.c.b16 %v53, %v52
    %v56 = vpack.c.b16 %v54, %v54
    %vm58 = vcmask 187392
    %v60 = vsel %vm58, %v47, 0
    %v63 = vsel %vm58, %v48, 0
    %vm65 = vcmask 1042432
    %vm66 = vcmask 1043456
    %v67 = vsel %vm65, 4294967295, 65535
    %v68 = vsel %vm66, %v67, 0
    %v70 = vand.u32 %v56, %v68
    %72 = vmatprep.subr.bf16.mxu0 0
    %73 = vmatpush1.bf16.msra.mxu0 0
    %74 = vmatprep.subr.bf16.mxu0 0
    %75 = vmatpush1.bf16.msra.mxu0 0
    %76 = vmatprep.subr.bf16.mxu0 0
    %77 = vmatpush1.bf16.msra.mxu0 0
    %78 = vmatprep.subr.bf16.mxu0 0
    %79 = vmatpush1.bf16.msra.mxu0 0
    %80 = vmatprep.subr.bf16.mxu0 0
    %81 = vmatpush1.bf16.msra.mxu0 0
    %82 = vmatprep.subr.bf16.mxu0 0
    %83 = vmatpush1.bf16.msra.mxu0 0
    %84 = vmatprep.subr.bf16.mxu0 0
    %85 = vmatpush1.bf16.msra.mxu0 %v70
    %86 = vmatprep.subr.bf16.mxu0 0
    %87 = vmatpush1.bf16.msra.mxu0 %v55
    %88 = vmatprep.subr.bf16.mxu0 0
    %89 = vmatpush2.bf16.msra.mxu0 0
    %90 = vmatprep.subr.bf16.mxu0 0
    %91 = vmatpush2.bf16.msra.mxu0 0
    %92 = vmatprep.subr.bf16.mxu0 0
    %93 = vmatpush2.bf16.msra.mxu0 0
    %94 = vmatprep.subr.bf16.mxu0 0
    %95 = vmatpush2.bf16.msra.mxu0 0
    %96 = vmatprep.subr.bf16.mxu0 0
    %97 = vmatpush2.bf16.msra.mxu0 0
    %98 = vmatprep.subr.bf16.mxu0 0
    %99 = vmatpush2.bf16.msra.mxu0 0
    %100 = vmatprep.subr.bf16.mxu0 0
    %101 = vmatpush2.bf16.msra.mxu0 0
    %102 = vmatprep.subr.bf16.mxu0 0
    %103 = vmatpush2.bf16.msra.mxu0 0
    %104 = vmatprep.mubr.bf16.mxu0 0
    %105 = vmatmul.mubr.bf16.gmra.mxu0 %v60
    %v106 = vpop.f32.mrf.mxu0
    %v107 = vadd.f32 %v37, %v106
    %v108 = vpop.f32.mrf.mxu0
    %v109 = vpop.f32.mrf.mxu0
    %v110 = vadd.f32 %v37, %v109
    %v111 = vpop.f32.mrf.mxu0
    %112 = vmatprep.mubr.bf16.mxu0 0
    %113 = vmatmul.mubr.bf16.gmra.mxu0 %v63
    %v114 = vpop.f32.mrf.mxu0
    %v115 = vadd.f32 %v37, %v114
    %v116 = vpop.f32.mrf.mxu0
    %v117 = vpop.f32.mrf.mxu0
    %v118 = vadd.f32 %v37, %v117
    %v119 = vpop.f32.mrf.mxu0
    %120 = vdwg.mxu0
    %v121 = vmax.f32 %v107, 0.0
    %v122 = vmax.f32 %v110, 0.0
    %v123 = vmax.f32 %v115, 0.0
    %v124 = vmax.f32 %v118, 0.0
    %v125 = vpack.c.bf16 %v122, %v121
    %v126 = vpack.c.bf16 %v124, %v123
    %v127 = vld [vmem:[%s3] sm:$0xf]
    %v128 = vld [vmem:[%s3 + $0x4] sm:$0xf]
    %v129 = vld [vmem:[%s3 + $0x8] sm:$0xf]
    %v130 = vld [vmem:[%s3 + $0xc] sm:$0xf]
    %v131 = vld [vmem:[%s4] sm:$0x1]
    %v133 = vlaneseq
    %v134 = vshrl.u32 %v133, 7
    %v135 = vsub.s32 0, %v134
    %v136 = vrot.slane %v131, %v135
    %v142 = vunpack.c.l.b16 %v127
    %v143 = vunpack.c.l.b16 %v128
    %v144 = vunpack.c.l.b16 %v129
    %v145 = vunpack.c.l.b16 %v130
    %v146 = vpack.c.b16 %v143, %v142
    %v147 = vpack.c.b16 %v145, %v144
    %vm150 = vcmask 261120
    %v152 = vsel %vm150, %v125, 0
    %v155 = vsel %vm150, %v126, 0
    %157 = vmatprep.subr.bf16.mxu0 0
    %158 = vmatpush1.bf16.msra.mxu0 0
    %159 = vmatprep.subr.bf16.mxu0 0
    %160 = vmatpush1.bf16.msra.mxu0 0
    %161 = vmatprep.subr.bf16.mxu0 0
    %162 = vmatpush1.bf16.msra.mxu0 0
    %163 = vmatprep.subr.bf16.mxu0 0
    %164 = vmatpush1.bf16.msra.mxu0 0
    %165 = vmatprep.subr.bf16.mxu0 0
    %166 = vmatpush1.bf16.msra.mxu0 0
    %167 = vmatprep.subr.bf16.mxu0 0
    %168 = vmatpush1.bf16.msra.mxu0 0
    %169 = vmatprep.subr.bf16.mxu0 0
    %170 = vmatpush1.bf16.msra.mxu0 %v147
    %171 = vmatprep.subr.bf16.mxu0 0
    %172 = vmatpush1.bf16.msra.mxu0 %v146
    %173 = vmatprep.subr.bf16.mxu0 0
    %174 = vmatpush2.bf16.msra.mxu0 0
    %175 = vmatprep.subr.bf16.mxu0 0
    %176 = vmatpush2.bf16.msra.mxu0 0
    %177 = vmatprep.subr.bf16.mxu0 0
    %178 = vmatpush2.bf16.msra.mxu0 0
    %179 = vmatprep.subr.bf16.mxu0 0
    %180 = vmatpush2.bf16.msra.mxu0 0
    %181 = vmatprep.subr.bf16.mxu0 0
    %182 = vmatpush2.bf16.msra.mxu0 0
    %183 = vmatprep.subr.bf16.mxu0 0
    %184 = vmatpush2.bf16.msra.mxu0 0
    %185 = vmatprep.subr.bf16.mxu0 0
    %186 = vmatpush2.bf16.msra.mxu0 0
    %187 = vmatprep.subr.bf16.mxu0 0
    %188 = vmatpush2.bf16.msra.mxu0 0
    %189 = vmatprep.mubr.bf16.mxu0 0
    %190 = vmatmul.mubr.bf16.gmra.mxu0 %v152
    %v191 = vpop.f32.mrf.mxu0
    %v192 = vadd.f32 %v136, %v191
    %v193 = vpop.f32.mrf.mxu0
    %v194 = vpop.f32.mrf.mxu0
    %v195 = vadd.f32 %v136, %v194
    %v196 = vpop.f32.mrf.mxu0
    %197 = vmatprep.mubr.bf16.mxu0 0
    %198 = vmatmul.mubr.bf16.gmra.mxu0 %v155
    %v199 = vpop.f32.mrf.mxu0
    %v200 = vadd.f32 %v136, %v199
    %v201 = vpop.f32.mrf.mxu0
    %v202 = vpop.f32.mrf.mxu0
    %v203 = vadd.f32 %v136, %v202
    %v204 = vpop.f32.mrf.mxu0
    %205 = vdwg.mxu0
    %v206 = vmax.f32 %v192, 0.0
    %v207 = vmax.f32 %v195, 0.0
    %v208 = vmax.f32 %v200, 0.0
    %v209 = vmax.f32 %v203, 0.0
    %v210 = vld [vmem:[%s5] sm:$0x1]
    %v212 = vlaneseq
    %v213 = vshrl.u32 %v212, 7
    %v214 = vsub.s32 0, %v213
    %v215 = vrot.slane %v210, %v214
    %v217 = vmul.f32 %v206, %v215
    %v218 = vmul.f32 %v207, %v215
    %v219 = vmul.f32 %v208, %v215
    %v220 = vmul.f32 %v209, %v215
    %v221 = vsel %vm150, %v217, 0.0
    %222 = vadd.xlane.f32.xlu0 %v221
    %v223 = vpop.xlane.xlu0 %222
    %v224 = vsel %vm150, %v218, 0.0
    %225 = vadd.xlane.f32.xlu0 %v224
    %v226 = vpop.xlane.xlu0 %225
    %v227 = vsel %vm150, %v219, 0.0
    %228 = vadd.xlane.f32.xlu0 %v227
    %v229 = vpop.xlane.xlu0 %228
    %v230 = vsel %vm150, %v220, 0.0
    %231 = vadd.xlane.f32.xlu0 %v230
    %v232 = vpop.xlane.xlu0 %231
    %s233 = scalar_lea.vmem %s1, 12
    %v234 = vld [vmem:[%s233] sm:$0xf]
    %v235 = vld [vmem:[%s233 + $0x4] sm:$0xf]
    %v236 = vld [vmem:[%s233 + $0x8] sm:$0xf]
    %s237 = scalar_lea.vmem %s2, 1
    %v238 = vld [vmem:[%s237] sm:$0x1]
    %v240 = vlaneseq
    %v241 = vshrl.u32 %v240, 7
    %v242 = vsub.s32 0, %v241
    %v243 = vrot.slane %v238, %v242
    %v248 = vunpack.c.l.b16 %v234
    %v249 = vunpack.c.l.b16 %v235
    %v250 = vunpack.c.l.b16 %v236
    %v251 = vpack.c.b16 %v249, %v248
    %v252 = vpack.c.b16 %v250, %v250
    %v255 = vand.u32 %v252, %v68
    %257 = vmatprep.subr.bf16.mxu0 0
    %258 = vmatpush1.bf16.msra.mxu0 0
    %259 = vmatprep.subr.bf16.mxu0 0
    %260 = vmatpush1.bf16.msra.mxu0 0
    %261 = vmatprep.subr.bf16.mxu0 0
    %262 = vmatpush1.bf16.msra.mxu0 0
    %263 = vmatprep.subr.bf16.mxu0 0
    %264 = vmatpush1.bf16.msra.mxu0 0
    %265 = vmatprep.subr.bf16.mxu0 0
    %266 = vmatpush1.bf16.msra.mxu0 0
    %267 = vmatprep.subr.bf16.mxu0 0
    %268 = vmatpush1.bf16.msra.mxu0 0
    %269 = vmatprep.subr.bf16.mxu0 0
    %270 = vmatpush1.bf16.msra.mxu0 %v255
    %271 = vmatprep.subr.bf16.mxu0 0
    %272 = vmatpush1.bf16.msra.mxu0 %v251
    %273 = vmatprep.subr.bf16.mxu0 0
    %274 = vmatpush2.bf16.msra.mxu0 0
    %275 = vmatprep.subr.bf16.mxu0 0
    %276 = vmatpush2.bf16.msra.mxu0 0
    %277 = vmatprep.subr.bf16.mxu0 0
    %278 = vmatpush2.bf16.msra.mxu0 0
    %279 = vmatprep.subr.bf16.mxu0 0
    %280 = vmatpush2.bf16.msra.mxu0 0
    %281 = vmatprep.subr.bf16.mxu0 0
    %282 = vmatpush2.bf16.msra.mxu0 0
    %283 = vmatprep.subr.bf16.mxu0 0
    %284 = vmatpush2.bf16.msra.mxu0 0
    %285 = vmatprep.subr.bf16.mxu0 0
    %286 = vmatpush2.bf16.msra.mxu0 0
    %287 = vmatprep.subr.bf16.mxu0 0
    %288 = vmatpush2.bf16.msra.mxu0 0
    %289 = vmatprep.mubr.bf16.mxu0 0
    %290 = vmatmul.mubr.bf16.gmra.mxu0 %v60
    %v291 = vpop.f32.mrf.mxu0
    %v292 = vadd.f32 %v243, %v291
    %v293 = vpop.f32.mrf.mxu0
    %v294 = vpop.f32.mrf.mxu0
    %v295 = vadd.f32 %v243, %v294
    %v296 = vpop.f32.mrf.mxu0
    %297 = vmatprep.mubr.bf16.mxu0 0
    %298 = vmatmul.mubr.bf16.gmra.mxu0 %v63
    %v299 = vpop.f32.mrf.mxu0
    %v300 = vadd.f32 %v243, %v299
    %v301 = vpop.f32.mrf.mxu0
    %v302 = vpop.f32.mrf.mxu0
    %v303 = vadd.f32 %v243, %v302
    %v304 = vpop.f32.mrf.mxu0
    %305 = vdwg.mxu0
    %v306 = vmax.f32 %v292, 0.0
    %v307 = vmax.f32 %v295, 0.0
    %v308 = vmax.f32 %v300, 0.0
    %v309 = vmax.f32 %v303, 0.0
    %v310 = vpack.c.bf16 %v307, %v306
    %v311 = vpack.c.bf16 %v309, %v308
    %s312 = scalar_lea.vmem %s3, 16
    %v313 = vld [vmem:[%s312] sm:$0xf]
    %v314 = vld [vmem:[%s312 + $0x4] sm:$0xf]
    %v315 = vld [vmem:[%s312 + $0x8] sm:$0xf]
    %v316 = vld [vmem:[%s312 + $0xc] sm:$0xf]
    %s317 = scalar_lea.vmem %s4, 1
    %v318 = vld [vmem:[%s317] sm:$0x1]
    %v320 = vlaneseq
    %v321 = vshrl.u32 %v320, 7
    %v322 = vsub.s32 0, %v321
    %v323 = vrot.slane %v318, %v322
    %v329 = vunpack.c.l.b16 %v313
    %v330 = vunpack.c.l.b16 %v314
    %v331 = vunpack.c.l.b16 %v315
    %v332 = vunpack.c.l.b16 %v316
    %v333 = vpack.c.b16 %v330, %v329
    %v334 = vpack.c.b16 %v332, %v331
    %v338 = vsel %vm150, %v310, 0
    %v341 = vsel %vm150, %v311, 0
    %343 = vmatprep.subr.bf16.mxu0 0
    %344 = vmatpush1.bf16.msra.mxu0 0
    %345 = vmatprep.subr.bf16.mxu0 0
    %346 = vmatpush1.bf16.msra.mxu0 0
    %347 = vmatprep.subr.bf16.mxu0 0
    %348 = vmatpush1.bf16.msra.mxu0 0
    %349 = vmatprep.subr.bf16.mxu0 0
    %350 = vmatpush1.bf16.msra.mxu0 0
    %351 = vmatprep.subr.bf16.mxu0 0
    %352 = vmatpush1.bf16.msra.mxu0 0
    %353 = vmatprep.subr.bf16.mxu0 0
    %354 = vmatpush1.bf16.msra.mxu0 0
    %355 = vmatprep.subr.bf16.mxu0 0
    %356 = vmatpush1.bf16.msra.mxu0 %v334
    %357 = vmatprep.subr.bf16.mxu0 0
    %358 = vmatpush1.bf16.msra.mxu0 %v333
    %359 = vmatprep.subr.bf16.mxu0 0
    %360 = vmatpush2.bf16.msra.mxu0 0
    %361 = vmatprep.subr.bf16.mxu0 0
    %362 = vmatpush2.bf16.msra.mxu0 0
    %363 = vmatprep.subr.bf16.mxu0 0
    %364 = vmatpush2.bf16.msra.mxu0 0
    %365 = vmatprep.subr.bf16.mxu0 0
    %366 = vmatpush2.bf16.msra.mxu0 0
    %367 = vmatprep.subr.bf16.mxu0 0
    %368 = vmatpush2.bf16.msra.mxu0 0
    %369 = vmatprep.subr.bf16.mxu0 0
    %370 = vmatpush2.bf16.msra.mxu0 0
    %371 = vmatprep.subr.bf16.mxu0 0
    %372 = vmatpush2.bf16.msra.mxu0 0
    %373 = vmatprep.subr.bf16.mxu0 0
    %374 = vmatpush2.bf16.msra.mxu0 0
    %375 = vmatprep.mubr.bf16.mxu0 0
    %376 = vmatmul.mubr.bf16.gmra.mxu0 %v338
    %v377 = vpop.f32.mrf.mxu0
    %v378 = vadd.f32 %v323, %v377
    %v379 = vpop.f32.mrf.mxu0
    %v380 = vpop.f32.mrf.mxu0
    %v381 = vadd.f32 %v323, %v380
    %v382 = vpop.f32.mrf.mxu0
    %383 = vmatprep.mubr.bf16.mxu0 0
    %384 = vmatmul.mubr.bf16.gmra.mxu0 %v341
    %v385 = vpop.f32.mrf.mxu0
    %v386 = vadd.f32 %v323, %v385
    %v387 = vpop.f32.mrf.mxu0
    %v388 = vpop.f32.mrf.mxu0
    %v389 = vadd.f32 %v323, %v388
    %v390 = vpop.f32.mrf.mxu0
    %391 = vdwg.mxu0
    %v392 = vmax.f32 %v378, 0.0
    %v393 = vmax.f32 %v381, 0.0
    %v394 = vmax.f32 %v386, 0.0
    %v395 = vmax.f32 %v389, 0.0
    %s396 = scalar_lea.vmem %s5, 1
    %v397 = vld [vmem:[%s396] sm:$0x1]
    %v399 = vlaneseq
    %v400 = vshrl.u32 %v399, 7
    %v401 = vsub.s32 0, %v400
    %v402 = vrot.slane %v397, %v401
    %v404 = vmul.f32 %v392, %v402
    %v405 = vmul.f32 %v393, %v402
    %v406 = vmul.f32 %v394, %v402
    %v407 = vmul.f32 %v395, %v402
    %v408 = vsel %vm150, %v404, 0.0
    %409 = vadd.xlane.f32.xlu0 %v408
    %v410 = vpop.xlane.xlu0 %409
    %v411 = vsel %vm150, %v405, 0.0
    %412 = vadd.xlane.f32.xlu0 %v411
    %v413 = vpop.xlane.xlu0 %412
    %v414 = vsel %vm150, %v406, 0.0
    %415 = vadd.xlane.f32.xlu0 %v414
    %v416 = vpop.xlane.xlu0 %415
    %v417 = vsel %vm150, %v407, 0.0
    %418 = vadd.xlane.f32.xlu0 %v417
    %v419 = vpop.xlane.xlu0 %418
    %s420 = scalar_lea.vmem %s1, 24
    %v421 = vld [vmem:[%s420] sm:$0xf]
    %v422 = vld [vmem:[%s420 + $0x4] sm:$0xf]
    %v423 = vld [vmem:[%s420 + $0x8] sm:$0xf]
    %s424 = scalar_lea.vmem %s2, 2
    %v425 = vld [vmem:[%s424] sm:$0x1]
    %v427 = vlaneseq
    %v428 = vshrl.u32 %v427, 7
    %v429 = vsub.s32 0, %v428
    %v430 = vrot.slane %v425, %v429
    %v435 = vunpack.c.l.b16 %v421
    %v436 = vunpack.c.l.b16 %v422
    %v437 = vunpack.c.l.b16 %v423
    %v438 = vpack.c.b16 %v436, %v435
    %v439 = vpack.c.b16 %v437, %v437
    %v442 = vand.u32 %v439, %v68
    %444 = vmatprep.subr.bf16.mxu0 0
    %445 = vmatpush1.bf16.msra.mxu0 0
    %446 = vmatprep.subr.bf16.mxu0 0
    %447 = vmatpush1.bf16.msra.mxu0 0
    %448 = vmatprep.subr.bf16.mxu0 0
    %449 = vmatpush1.bf16.msra.mxu0 0
    %450 = vmatprep.subr.bf16.mxu0 0
    %451 = vmatpush1.bf16.msra.mxu0 0
    %452 = vmatprep.subr.bf16.mxu0 0
    %453 = vmatpush1.bf16.msra.mxu0 0
    %454 = vmatprep.subr.bf16.mxu0 0
    %455 = vmatpush1.bf16.msra.mxu0 0
    %456 = vmatprep.subr.bf16.mxu0 0
    %457 = vmatpush1.bf16.msra.mxu0 %v442
    %458 = vmatprep.subr.bf16.mxu0 0
    %459 = vmatpush1.bf16.msra.mxu0 %v438
    %460 = vmatprep.subr.bf16.mxu0 0
    %461 = vmatpush2.bf16.msra.mxu0 0
    %462 = vmatprep.subr.bf16.mxu0 0
    %463 = vmatpush2.bf16.msra.mxu0 0
    %464 = vmatprep.subr.bf16.mxu0 0
    %465 = vmatpush2.bf16.msra.mxu0 0
    %466 = vmatprep.subr.bf16.mxu0 0
    %467 = vmatpush2.bf16.msra.mxu0 0
    %468 = vmatprep.subr.bf16.mxu0 0
    %469 = vmatpush2.bf16.msra.mxu0 0
    %470 = vmatprep.subr.bf16.mxu0 0
    %471 = vmatpush2.bf16.msra.mxu0 0
    %472 = vmatprep.subr.bf16.mxu0 0
    %473 = vmatpush2.bf16.msra.mxu0 0
    %474 = vmatprep.subr.bf16.mxu0 0
    %475 = vmatpush2.bf16.msra.mxu0 0
    %476 = vmatprep.mubr.bf16.mxu0 0
    %477 = vmatmul.mubr.bf16.gmra.mxu0 %v60
    %v478 = vpop.f32.mrf.mxu0
    %v479 = vadd.f32 %v430, %v478
    %v480 = vpop.f32.mrf.mxu0
    %v481 = vpop.f32.mrf.mxu0
    %v482 = vadd.f32 %v430, %v481
    %v483 = vpop.f32.mrf.mxu0
    %484 = vmatprep.mubr.bf16.mxu0 0
    %485 = vmatmul.mubr.bf16.gmra.mxu0 %v63
    %v486 = vpop.f32.mrf.mxu0
    %v487 = vadd.f32 %v430, %v486
    %v488 = vpop.f32.mrf.mxu0
    %v489 = vpop.f32.mrf.mxu0
    %v490 = vadd.f32 %v430, %v489
    %v491 = vpop.f32.mrf.mxu0
    %492 = vdwg.mxu0
    %v493 = vmax.f32 %v479, 0.0
    %v494 = vmax.f32 %v482, 0.0
    %v495 = vmax.f32 %v487, 0.0
    %v496 = vmax.f32 %v490, 0.0
    %v497 = vpack.c.bf16 %v494, %v493
    %v498 = vpack.c.bf16 %v496, %v495
    %s499 = scalar_lea.vmem %s3, 32
    %v500 = vld [vmem:[%s499] sm:$0xf]
    %v501 = vld [vmem:[%s499 + $0x4] sm:$0xf]
    %v502 = vld [vmem:[%s499 + $0x8] sm:$0xf]
    %v503 = vld [vmem:[%s499 + $0xc] sm:$0xf]
    %s504 = scalar_lea.vmem %s4, 2
    %v505 = vld [vmem:[%s504] sm:$0x1]
    %v507 = vlaneseq
    %v508 = vshrl.u32 %v507, 7
    %v509 = vsub.s32 0, %v508
    %v510 = vrot.slane %v505, %v509
    %v516 = vunpack.c.l.b16 %v500
    %v517 = vunpack.c.l.b16 %v501
    %v518 = vunpack.c.l.b16 %v502
    %v519 = vunpack.c.l.b16 %v503
    %v520 = vpack.c.b16 %v517, %v516
    %v521 = vpack.c.b16 %v519, %v518
    %v525 = vsel %vm150, %v497, 0
    %v528 = vsel %vm150, %v498, 0
    %530 = vmatprep.subr.bf16.mxu0 0
    %531 = vmatpush1.bf16.msra.mxu0 0
    %532 = vmatprep.subr.bf16.mxu0 0
    %533 = vmatpush1.bf16.msra.mxu0 0
    %534 = vmatprep.subr.bf16.mxu0 0
    %535 = vmatpush1.bf16.msra.mxu0 0
    %536 = vmatprep.subr.bf16.mxu0 0
    %537 = vmatpush1.bf16.msra.mxu0 0
    %538 = vmatprep.subr.bf16.mxu0 0
    %539 = vmatpush1.bf16.msra.mxu0 0
    %540 = vmatprep.subr.bf16.mxu0 0
    %541 = vmatpush1.bf16.msra.mxu0 0
    %542 = vmatprep.subr.bf16.mxu0 0
    %543 = vmatpush1.bf16.msra.mxu0 %v521
    %544 = vmatprep.subr.bf16.mxu0 0
    %545 = vmatpush1.bf16.msra.mxu0 %v520
    %546 = vmatprep.subr.bf16.mxu0 0
    %547 = vmatpush2.bf16.msra.mxu0 0
    %548 = vmatprep.subr.bf16.mxu0 0
    %549 = vmatpush2.bf16.msra.mxu0 0
    %550 = vmatprep.subr.bf16.mxu0 0
    %551 = vmatpush2.bf16.msra.mxu0 0
    %552 = vmatprep.subr.bf16.mxu0 0
    %553 = vmatpush2.bf16.msra.mxu0 0
    %554 = vmatprep.subr.bf16.mxu0 0
    %555 = vmatpush2.bf16.msra.mxu0 0
    %556 = vmatprep.subr.bf16.mxu0 0
    %557 = vmatpush2.bf16.msra.mxu0 0
    %558 = vmatprep.subr.bf16.mxu0 0
    %559 = vmatpush2.bf16.msra.mxu0 0
    %560 = vmatprep.subr.bf16.mxu0 0
    %561 = vmatpush2.bf16.msra.mxu0 0
    %562 = vmatprep.mubr.bf16.mxu0 0
    %563 = vmatmul.mubr.bf16.gmra.mxu0 %v525
    %v564 = vpop.f32.mrf.mxu0
    %v565 = vadd.f32 %v510, %v564
    %v566 = vpop.f32.mrf.mxu0
    %v567 = vpop.f32.mrf.mxu0
    %v568 = vadd.f32 %v510, %v567
    %v569 = vpop.f32.mrf.mxu0
    %570 = vmatprep.mubr.bf16.mxu0 0
    %571 = vmatmul.mubr.bf16.gmra.mxu0 %v528
    %v572 = vpop.f32.mrf.mxu0
    %v573 = vadd.f32 %v510, %v572
    %v574 = vpop.f32.mrf.mxu0
    %v575 = vpop.f32.mrf.mxu0
    %v576 = vadd.f32 %v510, %v575
    %v577 = vpop.f32.mrf.mxu0
    %578 = vdwg.mxu0
    %v579 = vmax.f32 %v565, 0.0
    %v580 = vmax.f32 %v568, 0.0
    %v581 = vmax.f32 %v573, 0.0
    %v582 = vmax.f32 %v576, 0.0
    %s583 = scalar_lea.vmem %s5, 2
    %v584 = vld [vmem:[%s583] sm:$0x1]
    %v586 = vlaneseq
    %v587 = vshrl.u32 %v586, 7
    %v588 = vsub.s32 0, %v587
    %v589 = vrot.slane %v584, %v588
    %v591 = vmul.f32 %v579, %v589
    %v592 = vmul.f32 %v580, %v589
    %v593 = vmul.f32 %v581, %v589
    %v594 = vmul.f32 %v582, %v589
    %v595 = vsel %vm150, %v591, 0.0
    %596 = vadd.xlane.f32.xlu0 %v595
    %v597 = vpop.xlane.xlu0 %596
    %v598 = vsel %vm150, %v592, 0.0
    %599 = vadd.xlane.f32.xlu0 %v598
    %v600 = vpop.xlane.xlu0 %599
    %v601 = vsel %vm150, %v593, 0.0
    %602 = vadd.xlane.f32.xlu0 %v601
    %v603 = vpop.xlane.xlu0 %602
    %v604 = vsel %vm150, %v594, 0.0
    %605 = vadd.xlane.f32.xlu0 %v604
    %v606 = vpop.xlane.xlu0 %605
    %s607 = scalar_lea.vmem %s1, 36
    %v608 = vld [vmem:[%s607] sm:$0xf]
    %v609 = vld [vmem:[%s607 + $0x4] sm:$0xf]
    %v610 = vld [vmem:[%s607 + $0x8] sm:$0xf]
    %s611 = scalar_lea.vmem %s2, 3
    %v612 = vld [vmem:[%s611] sm:$0x1]
    %v614 = vlaneseq
    %v615 = vshrl.u32 %v614, 7
    %v616 = vsub.s32 0, %v615
    %v617 = vrot.slane %v612, %v616
    %v622 = vunpack.c.l.b16 %v608
    %v623 = vunpack.c.l.b16 %v609
    %v624 = vunpack.c.l.b16 %v610
    %v625 = vpack.c.b16 %v623, %v622
    %v626 = vpack.c.b16 %v624, %v624
    %v629 = vand.u32 %v626, %v68
    %631 = vmatprep.subr.bf16.mxu0 0
    %632 = vmatpush1.bf16.msra.mxu0 0
    %633 = vmatprep.subr.bf16.mxu0 0
    %634 = vmatpush1.bf16.msra.mxu0 0
    %635 = vmatprep.subr.bf16.mxu0 0
    %636 = vmatpush1.bf16.msra.mxu0 0
    %637 = vmatprep.subr.bf16.mxu0 0
    %638 = vmatpush1.bf16.msra.mxu0 0
    %639 = vmatprep.subr.bf16.mxu0 0
    %640 = vmatpush1.bf16.msra.mxu0 0
    %641 = vmatprep.subr.bf16.mxu0 0
    %642 = vmatpush1.bf16.msra.mxu0 0
    %643 = vmatprep.subr.bf16.mxu0 0
    %644 = vmatpush1.bf16.msra.mxu0 %v629
    %645 = vmatprep.subr.bf16.mxu0 0
    %646 = vmatpush1.bf16.msra.mxu0 %v625
    %647 = vmatprep.subr.bf16.mxu0 0
    %648 = vmatpush2.bf16.msra.mxu0 0
    %649 = vmatprep.subr.bf16.mxu0 0
    %650 = vmatpush2.bf16.msra.mxu0 0
    %651 = vmatprep.subr.bf16.mxu0 0
    %652 = vmatpush2.bf16.msra.mxu0 0
    %653 = vmatprep.subr.bf16.mxu0 0
    %654 = vmatpush2.bf16.msra.mxu0 0
    %655 = vmatprep.subr.bf16.mxu0 0
    %656 = vmatpush2.bf16.msra.mxu0 0
    %657 = vmatprep.subr.bf16.mxu0 0
    %658 = vmatpush2.bf16.msra.mxu0 0
    %659 = vmatprep.subr.bf16.mxu0 0
    %660 = vmatpush2.bf16.msra.mxu0 0
    %661 = vmatprep.subr.bf16.mxu0 0
    %662 = vmatpush2.bf16.msra.mxu0 0
    %663 = vmatprep.mubr.bf16.mxu0 0
    %664 = vmatmul.mubr.bf16.gmra.mxu0 %v60
    %v665 = vpop.f32.mrf.mxu0
    %v666 = vadd.f32 %v617, %v665
    %v667 = vpop.f32.mrf.mxu0
    %v668 = vpop.f32.mrf.mxu0
    %v669 = vadd.f32 %v617, %v668
    %v670 = vpop.f32.mrf.mxu0
    %671 = vmatprep.mubr.bf16.mxu0 0
    %672 = vmatmul.mubr.bf16.gmra.mxu0 %v63
    %v673 = vpop.f32.mrf.mxu0
    %v674 = vadd.f32 %v617, %v673
    %v675 = vpop.f32.mrf.mxu0
    %v676 = vpop.f32.mrf.mxu0
    %v677 = vadd.f32 %v617, %v676
    %v678 = vpop.f32.mrf.mxu0
    %679 = vdwg.mxu0
    %v680 = vmax.f32 %v666, 0.0
    %v681 = vmax.f32 %v669, 0.0
    %v682 = vmax.f32 %v674, 0.0
    %v683 = vmax.f32 %v677, 0.0
    %v684 = vpack.c.bf16 %v681, %v680
    %v685 = vpack.c.bf16 %v683, %v682
    %s686 = scalar_lea.vmem %s3, 48
    %v687 = vld [vmem:[%s686] sm:$0xf]
    %v688 = vld [vmem:[%s686 + $0x4] sm:$0xf]
    %v689 = vld [vmem:[%s686 + $0x8] sm:$0xf]
    %v690 = vld [vmem:[%s686 + $0xc] sm:$0xf]
    %s691 = scalar_lea.vmem %s4, 3
    %v692 = vld [vmem:[%s691] sm:$0x1]
    %v694 = vlaneseq
    %v695 = vshrl.u32 %v694, 7
    %v696 = vsub.s32 0, %v695
    %v697 = vrot.slane %v692, %v696
    %v703 = vunpack.c.l.b16 %v687
    %v704 = vunpack.c.l.b16 %v688
    %v705 = vunpack.c.l.b16 %v689
    %v706 = vunpack.c.l.b16 %v690
    %v707 = vpack.c.b16 %v704, %v703
    %v708 = vpack.c.b16 %v706, %v705
    %v712 = vsel %vm150, %v684, 0
    %v715 = vsel %vm150, %v685, 0
    %717 = vmatprep.subr.bf16.mxu0 0
    %718 = vmatpush1.bf16.msra.mxu0 0
    %719 = vmatprep.subr.bf16.mxu0 0
    %720 = vmatpush1.bf16.msra.mxu0 0
    %721 = vmatprep.subr.bf16.mxu0 0
    %722 = vmatpush1.bf16.msra.mxu0 0
    %723 = vmatprep.subr.bf16.mxu0 0
    %724 = vmatpush1.bf16.msra.mxu0 0
    %725 = vmatprep.subr.bf16.mxu0 0
    %726 = vmatpush1.bf16.msra.mxu0 0
    %727 = vmatprep.subr.bf16.mxu0 0
    %728 = vmatpush1.bf16.msra.mxu0 0
    %729 = vmatprep.subr.bf16.mxu0 0
    %730 = vmatpush1.bf16.msra.mxu0 %v708
    %731 = vmatprep.subr.bf16.mxu0 0
    %732 = vmatpush1.bf16.msra.mxu0 %v707
    %733 = vmatprep.subr.bf16.mxu0 0
    %734 = vmatpush2.bf16.msra.mxu0 0
    %735 = vmatprep.subr.bf16.mxu0 0
    %736 = vmatpush2.bf16.msra.mxu0 0
    %737 = vmatprep.subr.bf16.mxu0 0
    %738 = vmatpush2.bf16.msra.mxu0 0
    %739 = vmatprep.subr.bf16.mxu0 0
    %740 = vmatpush2.bf16.msra.mxu0 0
    %741 = vmatprep.subr.bf16.mxu0 0
    %742 = vmatpush2.bf16.msra.mxu0 0
    %743 = vmatprep.subr.bf16.mxu0 0
    %744 = vmatpush2.bf16.msra.mxu0 0
    %745 = vmatprep.subr.bf16.mxu0 0
    %746 = vmatpush2.bf16.msra.mxu0 0
    %747 = vmatprep.subr.bf16.mxu0 0
    %748 = vmatpush2.bf16.msra.mxu0 0
    %749 = vmatprep.mubr.bf16.mxu0 0
    %750 = vmatmul.mubr.bf16.gmra.mxu0 %v712
    %v751 = vpop.f32.mrf.mxu0
    %v752 = vadd.f32 %v697, %v751
    %v753 = vpop.f32.mrf.mxu0
    %v754 = vpop.f32.mrf.mxu0
    %v755 = vadd.f32 %v697, %v754
    %v756 = vpop.f32.mrf.mxu0
    %757 = vmatprep.mubr.bf16.mxu0 0
    %758 = vmatmul.mubr.bf16.gmra.mxu0 %v715
    %v759 = vpop.f32.mrf.mxu0
    %v760 = vadd.f32 %v697, %v759
    %v761 = vpop.f32.mrf.mxu0
    %v762 = vpop.f32.mrf.mxu0
    %v763 = vadd.f32 %v697, %v762
    %v764 = vpop.f32.mrf.mxu0
    %765 = vdwg.mxu0
    %v766 = vmax.f32 %v752, 0.0
    %v767 = vmax.f32 %v755, 0.0
    %v768 = vmax.f32 %v760, 0.0
    %v769 = vmax.f32 %v763, 0.0
    %s770 = scalar_lea.vmem %s5, 3
    %v771 = vld [vmem:[%s770] sm:$0x1]
    %v773 = vlaneseq
    %v774 = vshrl.u32 %v773, 7
    %v775 = vsub.s32 0, %v774
    %v776 = vrot.slane %v771, %v775
    %v778 = vmul.f32 %v766, %v776
    %v779 = vmul.f32 %v767, %v776
    %v780 = vmul.f32 %v768, %v776
    %v781 = vmul.f32 %v769, %v776
    %v782 = vsel %vm150, %v778, 0.0
    %783 = vadd.xlane.f32.xlu0 %v782
    %v784 = vpop.xlane.xlu0 %783
    %v785 = vsel %vm150, %v779, 0.0
    %786 = vadd.xlane.f32.xlu0 %v785
    %v787 = vpop.xlane.xlu0 %786
    %v788 = vsel %vm150, %v780, 0.0
    %789 = vadd.xlane.f32.xlu0 %v788
    %v790 = vpop.xlane.xlu0 %789
    %v791 = vsel %vm150, %v781, 0.0
    %792 = vadd.xlane.f32.xlu0 %v791
    %v793 = vpop.xlane.xlu0 %792
    %v798 = vlaneseq
    %v799 = vand.u32 %v798, 127
    %v800 = vlaneseq
    %v801 = vshrl.u32 %v800, 7
    %v802 = vsub.s32 %v799, %v801
    %v803 = vrot.slane %v223, %v802
    %v804 = vadd.s32 %v799, 4294967288
    %v805 = vlaneseq
    %v806 = vshrl.u32 %v805, 7
    %v807 = vsub.s32 %v804, %v806
    %v808 = vrot.slane %v226, %v807
    %vm809 = vcmask 130112
    %v810 = vsel %vm809, %v808, %v803
    %v811 = vadd.s32 %v799, 4294967280
    %v812 = vlaneseq
    %v813 = vshrl.u32 %v812, 7
    %v814 = vsub.s32 %v811, %v813
    %v815 = vrot.slane %v229, %v814
    %vm816 = vcmask 195712
    %v817 = vsel %vm816, %v815, %v810
    %v818 = vadd.s32 %v799, 4294967272
    %v819 = vlaneseq
    %v820 = vshrl.u32 %v819, 7
    %v821 = vsub.s32 %v818, %v820
    %v822 = vrot.slane %v232, %v821
    %vm823 = vcmask 261312
    %v824 = vsel %vm823, %v822, %v817
    %v830 = vlaneseq
    %v831 = vshrl.u32 %v830, 7
    %v832 = vsub.s32 %v799, %v831
    %v833 = vrot.slane %v410, %v832
    %v834 = vlaneseq
    %v835 = vshrl.u32 %v834, 7
    %v836 = vsub.s32 %v804, %v835
    %v837 = vrot.slane %v413, %v836
    %v838 = vsel %vm809, %v837, %v833
    %v839 = vlaneseq
    %v840 = vshrl.u32 %v839, 7
    %v841 = vsub.s32 %v811, %v840
    %v842 = vrot.slane %v416, %v841
    %v843 = vsel %vm816, %v842, %v838
    %v844 = vlaneseq
    %v845 = vshrl.u32 %v844, 7
    %v846 = vsub.s32 %v818, %v845
    %v847 = vrot.slane %v419, %v846
    %v848 = vsel %vm823, %v847, %v843
    %v854 = vlaneseq
    %v855 = vshrl.u32 %v854, 7
    %v856 = vsub.s32 %v799, %v855
    %v857 = vrot.slane %v597, %v856
    %v858 = vlaneseq
    %v859 = vshrl.u32 %v858, 7
    %v860 = vsub.s32 %v804, %v859
    %v861 = vrot.slane %v600, %v860
    %v862 = vsel %vm809, %v861, %v857
    %v863 = vlaneseq
    %v864 = vshrl.u32 %v863, 7
    %v865 = vsub.s32 %v811, %v864
    %v866 = vrot.slane %v603, %v865
    %v867 = vsel %vm816, %v866, %v862
    %v868 = vlaneseq
    %v869 = vshrl.u32 %v868, 7
    %v870 = vsub.s32 %v818, %v869
    %v871 = vrot.slane %v606, %v870
    %v872 = vsel %vm823, %v871, %v867
    %v878 = vlaneseq
    %v879 = vshrl.u32 %v878, 7
    %v880 = vsub.s32 %v799, %v879
    %v881 = vrot.slane %v784, %v880
    %v882 = vlaneseq
    %v883 = vshrl.u32 %v882, 7
    %v884 = vsub.s32 %v804, %v883
    %v885 = vrot.slane %v787, %v884
    %v886 = vsel %vm809, %v885, %v881
    %v887 = vlaneseq
    %v888 = vshrl.u32 %v887, 7
    %v889 = vsub.s32 %v811, %v888
    %v890 = vrot.slane %v790, %v889
    %v891 = vsel %vm816, %v890, %v886
    %v892 = vlaneseq
    %v893 = vshrl.u32 %v892, 7
    %v894 = vsub.s32 %v818, %v893
    %v895 = vrot.slane %v793, %v894
    %v896 = vsel %vm823, %v895, %v891
    %vm898 = vcmask 1040384
    %v899 = vsel %vm898, %v824, %v848
    %vm900 = vcmask 1041408
    %v901 = vsel %vm900, %v899, %v872
    %v902 = vsel %vm65, %v901, %v896
    %vm903 = vcmask 257024
    %904 = vst.msk [vmem:[#allocation2] sm:$0xf] %vm903, %v902
    // Predicated region
    $region26: #{tpu_custom_call.1} parent=1 // pred_check
      _
    $region27: #{tpu_custom_call.1} parent=1 // pred_check_branch
      %906 = sbr.rel (0) target = $region29
    $region28: #{tpu_custom_call.1} parent=1 // pred_region
      %s908 = ssub.s32 64, 64
      %909 = vsyncadd [#allocation3], %s908
      %s911 = sshll.u32 [#allocation2], 4
      %s912 = int_to_ptr.vmem [resolvable:$true] %s911
      %914 = dma.vmem_to_hbm [thread:$0]  %s912, 64, %s6, [#allocation3]
    $region29: #{tpu_custom_call.1} parent=1 // pred_fallthru
      _
    // Predicated region
    $region30: #{tpu_custom_call.1} parent=1 // pred_check
      _
    $region31: #{tpu_custom_call.1} parent=1 // pred_check_branch
      %916 = sbr.rel (0) target = $region33
    $region32: #{tpu_custom_call.1} parent=1 // pred_region
      %917 = dma.done [#allocation3], 64
    $region33: #{tpu_custom_call.1} parent=1 // pred_fallthru
      _
    %918 = vsyncpa [#allocation3], 1

</llo_original>
